<compile_context>
chip_gen: v7x
topology: tpu7x:2x2x1
jax: 0.10.0
libtpu: 0.0.40
codegen_flags: <defaults>
</compile_context>

<pallas_src>
import functools

import jax
import jax.numpy as jnp
from jax.experimental import pallas as pl
from jax.experimental.pallas import tpu as pltpu

N_FEATURES = 20
N_CLASSES = 2
HIDDEN_UNITS = 10


def _round_up(n, m):
    return ((n + m - 1) // m) * m


def _mlp_kernel(xT_ref, w1_ref, b1_ref, w2_ref, b2_ref, o_ref):
    # xT_ref: (N_FEATURES, TB) bf16  -- batch on the lane axis.
    # w1_ref: (HIDDEN, N_FEATURES) bf16  (PyTorch (out, in) layout == already the
    #         left-operand layout we need).
    # b1_ref: (HIDDEN, 1) f32; w2_ref: (N_CLASSES, HIDDEN) f32; b2_ref: (N_CLASSES, 1) f32.
    # o_ref : (N_CLASSES, TB) f32.
    xT = xT_ref[...]

    # Hidden layer: hT = relu(W1 @ xT + b1)   (MXU bf16 matmul, f32 accumulation)
    hT = jnp.dot(w1_ref[...], xT, preferred_element_type=jnp.float32) + b1_ref[...]
    hT = jnp.maximum(hT, 0.0)
    # Dropout(p=0) is the identity -- nothing to do.

    # Output layer: logitsT = W2 @ hT + b2   -> (N_CLASSES, TB), f32
    logitsT = jnp.dot(w2_ref[...], hT, preferred_element_type=jnp.float32) + b2_ref[...]

    # Binary softmax via sigmoid of the logit difference:
    #   p0 = 1 / (1 + exp(l1 - l0)),  p1 = 1 - p0
    # exp + approx reciprocal both go to the EUP slot; no reductions needed.
    d = logitsT[0:1, :] - logitsT[1:2, :]                    # (1, TB)
    p0 = pl.reciprocal(1.0 + jnp.exp(-d), approx=True)       # sigmoid(d)
    o_ref[...] = jnp.concatenate([p0, 1.0 - p0], axis=0).astype(o_ref.dtype)


@functools.partial(jax.jit, static_argnames=("tb",))
def mlp_classifier_forward(x, w1, b1, w2, b2, *, tb=2048):
    """MLPClassifier forward.

    x : (B, N_FEATURES) f32
    w1: (HIDDEN_UNITS, N_FEATURES) f32   (PyTorch nn.Linear layout: (out, in))
    b1: (HIDDEN_UNITS,) f32
    w2: (N_CLASSES, HIDDEN_UNITS) f32
    b2: (N_CLASSES,) f32
    returns (B, N_CLASSES) f32 softmax probabilities.
    """
    B = x.shape[0]
    assert tb % 128 == 0, "tb must be a multiple of the 128-lane width"

    # Effective lane tile: multiple of 128, capped at tb; pad batch up to it.
    tb_eff = min(tb, _round_up(B, 128))
    Bp = _round_up(B, tb_eff)

    # Lane-dense bf16 input slab (features, batch); pad/transpose/cast fuse in XLA.
    xT = jnp.pad(x.astype(jnp.bfloat16).T, ((0, 0), (0, Bp - B)))
    w1b = w1.astype(jnp.bfloat16)                       # bulk weight traffic in bf16
    b1c = b1.reshape(HIDDEN_UNITS, 1).astype(jnp.float32)
    w2c = w2.astype(jnp.float32)                        # tiny; keep f32 accuracy
    b2c = b2.reshape(N_CLASSES, 1).astype(jnp.float32)

    grid = (Bp // tb_eff,)

    cost = pl.CostEstimate(
        flops=2 * Bp * (N_FEATURES * HIDDEN_UNITS + HIDDEN_UNITS * N_CLASSES),
        transcendentals=2 * Bp,  # exp + approx reciprocal per sample
        bytes_accessed=(Bp * N_FEATURES * 2            # xT in (bf16)
                        + Bp * N_CLASSES * 4           # probs out (f32)
                        + w1b.size * 2 + b1c.size * 4
                        + w2c.size * 4 + b2c.size * 4),
    )

    outT = pl.pallas_call(
        _mlp_kernel,
        out_shape=jax.ShapeDtypeStruct((N_CLASSES, Bp), jnp.float32),
        grid=grid,
        in_specs=[
            pl.BlockSpec((N_FEATURES, tb_eff), lambda i: (0, i)),        # x tile (pipelined)
            pl.BlockSpec((HIDDEN_UNITS, N_FEATURES), lambda i: (0, 0)),  # W1 (VMEM-resident)
            pl.BlockSpec((HIDDEN_UNITS, 1), lambda i: (0, 0)),           # b1
            pl.BlockSpec((N_CLASSES, HIDDEN_UNITS), lambda i: (0, 0)),   # W2
            pl.BlockSpec((N_CLASSES, 1), lambda i: (0, 0)),              # b2
        ],
        out_specs=pl.BlockSpec((N_CLASSES, tb_eff), lambda i: (0, i)),   # lane-dense output
        compiler_params=pltpu.CompilerParams(
            dimension_semantics=("parallel",),   # megacore-shardable batch axis
        ),
        cost_estimate=cost,
    )(xT, w1b, b1c, w2c, b2c)

    # Back to the PyTorch-facing (B, N_CLASSES) layout (pure layout plumbing).
    return outT[:, :B].T


def init_params(key):
    """Deterministic init mimicking nn.Linear's uniform(-1/sqrt(fan_in), ...).

    Weights are kept in the PyTorch (out_features, in_features) layout.
    """
    k1, k2, k3, k4 = jax.random.split(key, 4)

    def lin(kw, kb, fan_in, fan_out):
        bound = 1.0 / (fan_in ** 0.5)
        w = jax.random.uniform(kw, (fan_out, fan_in), jnp.float32, -bound, bound)
        b = jax.random.uniform(kb, (fan_out,), jnp.float32, -bound, bound)
        return w, b

    w1, b1 = lin(k1, k2, N_FEATURES, HIDDEN_UNITS)
    w2, b2 = lin(k3, k4, HIDDEN_UNITS, N_CLASSES)
    return w1, b1, w2, b2


def reference_forward(x, w1, b1, w2, b2):
    """Exact f32 reference matching the PyTorch module semantics."""
    h = jnp.maximum(x @ w1.T + b1, 0.0)
    logits = h @ w2.T + b2
    return jax.nn.softmax(logits, axis=-1)


if __name__ == "__main__":
    key = jax.random.PRNGKey(0)
    kx, kp = jax.random.split(key)

    batch = 8
    x = jax.random.normal(kx, (batch, N_FEATURES), dtype=jnp.float32)
    w1, b1, w2, b2 = init_params(kp)

    out = mlp_classifier_forward(x, w1, b1, w2, b2)
    out = jax.block_until_ready(out)

    ref_exact = reference_forward(x, w1, b1, w2, b2)
    # Reference matching the kernel's intentional bf16 input quantization.
    ref_bf16 = reference_forward(
        x.astype(jnp.bfloat16).astype(jnp.float32),
        w1.astype(jnp.bfloat16).astype(jnp.float32),
        b1, w2, b2)

    assert out.shape == (batch, N_CLASSES)
    # Tight check vs the bf16-matched reference (covers accumulation order +
    # the EUP approximate reciprocal).
    assert jnp.allclose(out, ref_bf16, atol=1e-3, rtol=1e-3)
    # Looser sanity check vs the exact f32 module semantics (gap = bf16 inputs).
    assert jnp.allclose(out, ref_exact, atol=1e-2, rtol=1e-2)
    # p1 = 1 - p0 by construction, so rows sum to 1 to f32 rounding.
    assert jnp.allclose(jnp.sum(out, axis=-1), 1.0, atol=1e-5)

    print("KERNEL_OK")
</pallas_src>

<mosaic_0001>
module attributes {stable_mosaic.version = 11 : i64} {
  func.func @_mlp_kernel(%arg0: i32, %arg1: memref<20x128xbf16, #tpu.memory_space<vmem>>, %arg2: memref<10x20xbf16, #tpu.memory_space<vmem>>, %arg3: memref<10x1xf32, #tpu.memory_space<vmem>>, %arg4: memref<2x10xf32, #tpu.memory_space<vmem>>, %arg5: memref<2x1xf32, #tpu.memory_space<vmem>>, %arg6: memref<2x128xf32, #tpu.memory_space<vmem>>) attributes {dimension_semantics = [#tpu.dimension_semantics<parallel>], iteration_bounds = array<i64: 1>, scalar_prefetch = 0 : i64, scratch_operands = 0 : i64, tpu.core_type = #tpu.core_type<tc>, window_params = [{transform_indices = @transform_0, window_bounds = array<i64: 20, 128>}, {pipeline_mode = #tpu.pipeline_mode<synchronous>, transform_indices = @transform_1, window_bounds = array<i64: 10, 20>}, {pipeline_mode = #tpu.pipeline_mode<synchronous>, transform_indices = @transform_2, window_bounds = array<i64: 10, 1>}, {pipeline_mode = #tpu.pipeline_mode<synchronous>, transform_indices = @transform_3, window_bounds = array<i64: 2, 10>}, {pipeline_mode = #tpu.pipeline_mode<synchronous>, transform_indices = @transform_4, window_bounds = array<i64: 2, 1>}, {transform_indices = @transform_5, window_bounds = array<i64: 2, 128>}]} {
    %c0 = arith.constant 0 : index
    %c0_0 = arith.constant 0 : index
    %0 = vector.load %arg1[%c0, %c0_0] : memref<20x128xbf16, #tpu.memory_space<vmem>>, vector<20x128xbf16>
    %c0_1 = arith.constant 0 : index
    %c0_2 = arith.constant 0 : index
    %1 = vector.load %arg2[%c0_1, %c0_2] : memref<10x20xbf16, #tpu.memory_space<vmem>>, vector<10x20xbf16>
    %cst = arith.constant dense<0.000000e+00> : vector<10x128xf32>
    %2 = tpu.matmul %1, %0, %cst {dimension_numbers = #tpu.dot_dimension_numbers<[1], [0], [0], [1], [0, 0, 1, 1], [], []>} : vector<10x20xbf16>, vector<20x128xbf16>, vector<10x128xf32> -> vector<10x128xf32>
    %c0_3 = arith.constant 0 : index
    %c0_4 = arith.constant 0 : index
    %3 = vector.load %arg3[%c0_3, %c0_4] : memref<10x1xf32, #tpu.memory_space<vmem>>, vector<10x1xf32>
    %4 = vector.broadcast %3 : vector<10x1xf32> to vector<10x128xf32>
    %5 = arith.addf %2, %4 : vector<10x128xf32>
    %cst_5 = arith.constant 0.000000e+00 : f32
    %6 = vector.broadcast %cst_5 : f32 to vector<10x128xf32>
    %7 = arith.maximumf %5, %6 : vector<10x128xf32>
    %c0_6 = arith.constant 0 : index
    %c0_7 = arith.constant 0 : index
    %8 = vector.load %arg4[%c0_6, %c0_7] : memref<2x10xf32, #tpu.memory_space<vmem>>, vector<2x10xf32>
    %cst_8 = arith.constant dense<0.000000e+00> : vector<2x128xf32>
    %9 = tpu.matmul %8, %7, %cst_8 {dimension_numbers = #tpu.dot_dimension_numbers<[1], [0], [0], [1], [0, 0, 1, 1], [], []>} : vector<2x10xf32>, vector<10x128xf32>, vector<2x128xf32> -> vector<2x128xf32>
    %c0_9 = arith.constant 0 : index
    %c0_10 = arith.constant 0 : index
    %10 = vector.load %arg5[%c0_9, %c0_10] : memref<2x1xf32, #tpu.memory_space<vmem>>, vector<2x1xf32>
    %11 = vector.broadcast %10 : vector<2x1xf32> to vector<2x128xf32>
    %12 = arith.addf %9, %11 : vector<2x128xf32>
    %13 = vector.extract_strided_slice %12 {offsets = [0, 0], sizes = [1, 128], strides = [1, 1]} : vector<2x128xf32> to vector<1x128xf32>
    %14 = vector.extract_strided_slice %12 {offsets = [1, 0], sizes = [1, 128], strides = [1, 1]} : vector<2x128xf32> to vector<1x128xf32>
    %15 = arith.subf %13, %14 : vector<1x128xf32>
    %cst_11 = arith.constant 0.000000e+00 : f32
    %16 = vector.broadcast %cst_11 : f32 to vector<1x128xf32>
    %17 = arith.subf %16, %15 : vector<1x128xf32>
    %18 = math.exp %17 : vector<1x128xf32>
    %cst_12 = arith.constant 1.000000e+00 : f32
    %19 = vector.broadcast %cst_12 : f32 to vector<1x128xf32>
    %20 = arith.addf %19, %18 : vector<1x128xf32>
    %21 = tpu.reciprocal %20 {approx = true} : vector<1x128xf32> -> vector<1x128xf32>
    %cst_13 = arith.constant 1.000000e+00 : f32
    %22 = vector.broadcast %cst_13 : f32 to vector<1x128xf32>
    %23 = arith.subf %22, %21 : vector<1x128xf32>
    %24 = tpu.concatenate %21, %23 in 0 : vector<1x128xf32>, vector<1x128xf32> -> vector<2x128xf32>
    %c0_14 = arith.constant 0 : index
    %c0_15 = arith.constant 0 : index
    %25 = vector.load %arg6[%c0_14, %c0_15] : memref<2x128xf32, #tpu.memory_space<vmem>>, vector<2x128xf32>
    tpu.vector_store %arg6[%c0_14, %c0_15], %24 {strides = array<i32>} : memref<2x128xf32, #tpu.memory_space<vmem>>, vector<2x128xf32>,
    return
  }
  func.func @transform_0(%arg0: i32) -> (i32, i32) {
    %c0_i32 = arith.constant 0 : i32
    %c0_i32_0 = arith.constant 0 : i32
    return %c0_i32, %arg0 : i32, i32
  }
  func.func @transform_1(%arg0: i32) -> (i32, i32) {
    %c0_i32 = arith.constant 0 : i32
    %c0_i32_0 = arith.constant 0 : i32
    %c0_i32_1 = arith.constant 0 : i32
    return %c0_i32, %c0_i32_0 : i32, i32
  }
  func.func @transform_2(%arg0: i32) -> (i32, i32) {
    %c0_i32 = arith.constant 0 : i32
    %c0_i32_0 = arith.constant 0 : i32
    %c0_i32_1 = arith.constant 0 : i32
    return %c0_i32, %c0_i32_0 : i32, i32
  }
  func.func @transform_3(%arg0: i32) -> (i32, i32) {
    %c0_i32 = arith.constant 0 : i32
    %c0_i32_0 = arith.constant 0 : i32
    %c0_i32_1 = arith.constant 0 : i32
    return %c0_i32, %c0_i32_0 : i32, i32
  }
  func.func @transform_4(%arg0: i32) -> (i32, i32) {
    %c0_i32 = arith.constant 0 : i32
    %c0_i32_0 = arith.constant 0 : i32
    %c0_i32_1 = arith.constant 0 : i32
    return %c0_i32, %c0_i32_0 : i32, i32
  }
  func.func @transform_5(%arg0: i32) -> (i32, i32) {
    %c0_i32 = arith.constant 0 : i32
    %c0_i32_0 = arith.constant 0 : i32
    return %c0_i32, %arg0 : i32, i32
  }
}

</mosaic_0001>

<llo_original>
// kernel: mlp_classifier_forward.1
$region0: #{mlp_classifier_forward.1}
  #allocation0 [shape = 'u32[]', space=smem, size = 0x4, offset = 0x4, fixed_abs, tag = 'smem constant byte address 0x4 - core index']
  #allocation1 [shape = 'u32[144,128]{1,0:T(1,128)}', space=vmem, size = 0x12000, scoped, tag = 'internal scratch']
  %s0 = inlined_call_operand.vmem [shape: bf16[20,128], index: 0, kind: input, shape index: {}]
  %s1 = inlined_call_operand.vmem [shape: bf16[10,20], index: 1, kind: input, shape index: {}]
  %s2 = inlined_call_operand.vmem [shape: f32[10,1], index: 2, kind: input, shape index: {}]
  %s3 = inlined_call_operand.vmem [shape: f32[2,10], index: 3, kind: input, shape index: {}]
  %s4 = inlined_call_operand.vmem [shape: f32[2,1], index: 4, kind: input, shape index: {}]
  %s5 = inlined_call_operand.vmem [shape: f32[2,128], index: 5, kind: output, shape index: {}]
  %s6 = sld [smem:[#allocation0]]
  $region30: #{mlp_classifier_forward.1} parent=0
    _
  %s8 = ssub.s32 1, %s6
  %s9 = scalar_select 0, %s8, %s6
  // Predicated region
  $region2: #{mlp_classifier_forward.1} parent=0 // pred_check
    _
  $region3: #{mlp_classifier_forward.1} parent=0 // pred_check_branch
    %11 = sbr.rel (0) target = $region5
  $region4: #{mlp_classifier_forward.1} parent=0 // pred_region
    _
  $region5: #{mlp_classifier_forward.1} parent=0 // pred_fallthru
    _
  // Predicated region
  $region6: #{mlp_classifier_forward.1} parent=0 // pred_check
    _
  $region7: #{mlp_classifier_forward.1} parent=0 // pred_check_branch
    %13 = sbr.rel (0) target = $region9
  $region8: #{mlp_classifier_forward.1} parent=0 // pred_region
    _
  $region9: #{mlp_classifier_forward.1} parent=0 // pred_fallthru
    _
  // Predicated region
  $region10: #{mlp_classifier_forward.1} parent=0 // pred_check
    _
  $region11: #{mlp_classifier_forward.1} parent=0 // pred_check_branch
    %15 = sbr.rel (0) target = $region13
  $region12: #{mlp_classifier_forward.1} parent=0 // pred_region
    _
  $region13: #{mlp_classifier_forward.1} parent=0 // pred_fallthru
    _
  // Predicated region
  $region14: #{mlp_classifier_forward.1} parent=0 // pred_check
    _
  $region15: #{mlp_classifier_forward.1} parent=0 // pred_check_branch
    %17 = sbr.rel (0) target = $region17
  $region16: #{mlp_classifier_forward.1} parent=0 // pred_region
    _
  $region17: #{mlp_classifier_forward.1} parent=0 // pred_fallthru
    _
  // Predicated region
  $region18: #{mlp_classifier_forward.1} parent=0 // pred_check
    _
  $region19: #{mlp_classifier_forward.1} parent=0 // pred_check_branch
    %19 = sbr.rel (0) target = $region21
  $region20: #{mlp_classifier_forward.1} parent=0 // pred_region
    _
  $region21: #{mlp_classifier_forward.1} parent=0 // pred_fallthru
    _
  %v21 = vld [vmem:[%s0] sm:$0xf]
  %v22 = vld [vmem:[%s0 + $0x4] sm:$0xf]
  %v23 = vld [vmem:[%s0 + $0x8] sm:$0x3]
  %v24 = vld [vmem:[%s1] sm:$0xf]
  %v25 = vld [vmem:[%s1 + $0x4] sm:$0x1]
  %v26 = vld [vmem:[%s2] sm:$0xff]
  %v27 = vld [vmem:[%s2 + $0x8] sm:$0x3]
  %29 = vset.pattern.permute.xlu0 0
  %30 = vperm.xlu0 %29, %v26
  %v31 = vpop.permute.xlu0 %30
  %34 = vset.pattern.permute.xlu0 0
  %35 = vperm.xlu0 %34, %v27
  %v36 = vpop.permute.xlu0 %35
  %v40 = vunpack.c.l.b16 %v24
  %v41 = vunpack.c.l.b16 %v25
  %v42 = vpack.c.b16 %v41, %v40
  %v46 = vunpack.c.l.b16 %v21
  %v47 = vunpack.c.l.b16 %v22
  %v48 = vunpack.c.l.b16 %v23
  %v49 = vpack.c.b16 %v47, %v46
  %v50 = vpack.c.b16 %v48, %v48
  %vm52 = vcmask 162816
  %v54 = vsel %vm52, %v42, 0
  %vm56 = vcmask 1041408
  %v58 = vsel %vm56, %v50, 0
  %60 = vmatprep.subr.bf16.mxu0 0
  %61 = vmatpush1.bf16.msra.mxu0 %v49
  %62 = vmatprep.subr.bf16.mxu0 0
  %63 = vmatpush1.bf16.msra.mxu0 %v58
  %64 = vmatprep.subr.bf16.mxu0 0
  %65 = vmatpush1.bf16.msra.mxu0 0
  %66 = vmatprep.subr.bf16.mxu0 0
  %67 = vmatpush1.bf16.msra.mxu0 0
  %68 = vmatprep.subr.bf16.mxu0 0
  %69 = vmatpush1.bf16.msra.mxu0 0
  %70 = vmatprep.subr.bf16.mxu0 0
  %71 = vmatpush1.bf16.msra.mxu0 0
  %72 = vmatprep.subr.bf16.mxu0 0
  %73 = vmatpush1.bf16.msra.mxu0 0
  %74 = vmatprep.subr.bf16.mxu0 0
  %75 = vmatpush1.bf16.msra.mxu0 0
  %76 = vmatprep.subr.bf16.mxu0 0
  %77 = vmatpush1.bf16.msra.mxu0 0
  %78 = vmatprep.subr.bf16.mxu0 0
  %79 = vmatpush1.bf16.msra.mxu0 0
  %80 = vmatprep.subr.bf16.mxu0 0
  %81 = vmatpush1.bf16.msra.mxu0 0
  %82 = vmatprep.subr.bf16.mxu0 0
  %83 = vmatpush1.bf16.msra.mxu0 0
  %84 = vmatprep.subr.bf16.mxu0 0
  %85 = vmatpush1.bf16.msra.mxu0 0
  %86 = vmatprep.subr.bf16.mxu0 0
  %87 = vmatpush1.bf16.msra.mxu0 0
  %88 = vmatprep.subr.bf16.mxu0 0
  %89 = vmatpush1.bf16.msra.mxu0 0
  %90 = vmatprep.subr.bf16.mxu0 0
  %91 = vmatpush1.bf16.msra.mxu0 0
  %92 = vmatprep.mubr.bf16.mxu0 0
  %93 = vmatmul.mubr.bf16.gmra.mrb[0].mxu0 %v54
  %v94 = vpop.f32.mrb[0].mxu0
  %v95 = vadd.f32 %v31, %v94
  %v96 = vpop.f32.mrb[0].mxu0
  %v97 = vpop.f32.mrb[0].mxu0
  %v98 = vadd.f32 %v36, %v97
  %v99 = vpop.f32.mrb[0].mxu0
  %100 = vdwg.mxu0
  %v101 = vmax.f32 %v95, 0.0
  %v102 = vmax.f32 %v98, 0.0
  %v103 = vld [vmem:[%s3] sm:$0x3]
  %v104 = vld [vmem:[%s4] sm:$0x3]
  %106 = vset.pattern.permute.xlu0 0
  %107 = vperm.xlu0 %106, %v104
  %v108 = vpop.permute.xlu0 %107
  %vm110 = vcmask 80896
  %v112 = vsel %vm110, %v103, 0
  %v115 = vsel %vm56, %v102, 0
  %117 = vmatprep.subr.mxu0 0.0
  %118 = vmatpush1.msra.mxu0 %v101
  %119 = vmatprep.subr.mxu0 0.0
  %120 = vmatpush1.msra.mxu0 %v115
  %121 = vmatprep.subr.mxu0 0.0
  %122 = vmatpush1.msra.mxu0 0.0
  %123 = vmatprep.subr.mxu0 0.0
  %124 = vmatpush1.msra.mxu0 0.0
  %125 = vmatprep.subr.mxu0 0.0
  %126 = vmatpush1.msra.mxu0 0.0
  %127 = vmatprep.subr.mxu0 0.0
  %128 = vmatpush1.msra.mxu0 0.0
  %129 = vmatprep.subr.mxu0 0.0
  %130 = vmatpush1.msra.mxu0 0.0
  %131 = vmatprep.subr.mxu0 0.0
  %132 = vmatpush1.msra.mxu0 0.0
  %133 = vmatprep.subr.mxu0 0.0
  %134 = vmatpush1.msra.mxu0 0.0
  %135 = vmatprep.subr.mxu0 0.0
  %136 = vmatpush1.msra.mxu0 0.0
  %137 = vmatprep.subr.mxu0 0.0
  %138 = vmatpush1.msra.mxu0 0.0
  %139 = vmatprep.subr.mxu0 0.0
  %140 = vmatpush1.msra.mxu0 0.0
  %141 = vmatprep.subr.mxu0 0.0
  %142 = vmatpush1.msra.mxu0 0.0
  %143 = vmatprep.subr.mxu0 0.0
  %144 = vmatpush1.msra.mxu0 0.0
  %145 = vmatprep.subr.mxu0 0.0
  %146 = vmatpush1.msra.mxu0 0.0
  %147 = vmatprep.subr.mxu0 0.0
  %148 = vmatpush1.msra.mxu0 0.0
  %149 = vmatprep.subr.mxu0 0.0
  %150 = vmatpush1.msra.mxu0 0.0
  %151 = vmatprep.subr.mxu0 0.0
  %152 = vmatpush1.msra.mxu0 0.0
  %153 = vmatprep.subr.mxu0 0.0
  %154 = vmatpush1.msra.mxu0 0.0
  %155 = vmatprep.subr.mxu0 0.0
  %156 = vmatpush1.msra.mxu0 0.0
  %157 = vmatprep.subr.mxu0 0.0
  %158 = vmatpush1.msra.mxu0 0.0
  %159 = vmatprep.subr.mxu0 0.0
  %160 = vmatpush1.msra.mxu0 0.0
  %161 = vmatprep.subr.mxu0 0.0
  %162 = vmatpush1.msra.mxu0 0.0
  %163 = vmatprep.subr.mxu0 0.0
  %164 = vmatpush1.msra.mxu0 0.0
  %165 = vmatprep.subr.mxu0 0.0
  %166 = vmatpush1.msra.mxu0 0.0
  %167 = vmatprep.subr.mxu0 0.0
  %168 = vmatpush1.msra.mxu0 0.0
  %169 = vmatprep.subr.mxu0 0.0
  %170 = vmatpush1.msra.mxu0 0.0
  %171 = vmatprep.subr.mxu0 0.0
  %172 = vmatpush1.msra.mxu0 0.0
  %173 = vmatprep.subr.mxu0 0.0
  %174 = vmatpush1.msra.mxu0 0.0
  %175 = vmatprep.subr.mxu0 0.0
  %176 = vmatpush1.msra.mxu0 0.0
  %177 = vmatprep.subr.mxu0 0.0
  %178 = vmatpush1.msra.mxu0 0.0
  %179 = vmatprep.subr.mxu0 0.0
  %180 = vmatpush1.msra.mxu0 0.0
  %181 = vmatprep.mubr.f32.mxu0 0.0
  %182 = vmatmul.mubr.f32.gmra.mrb[0].mxu0 %v112
  %v183 = vpop.f32.mrb[0].mxu0
  %v184 = vadd.f32 %v108, %v183
  %v185 = vpop.f32.mrb[0].mxu0
  %186 = vdwg.mxu0
  %v188 = vrot.slane %v184, 1
  %v190 = vsub.f32 %v184, %v188
  %v191 = vsub.f32 0.0, %v190
  %v192 = vmul.f32 %v191, 1.442695
  %v193 = vpow.pop %v192
  %v194 = vadd.f32 %v193, 1.0
  %v195 = vrcp.pop %v194
  %v196 = vsub.f32 1.0, %v195
  %v198 = vrot.slane %v196, 7
  %vm200 = vcmask 1040384
  %v201 = vsel %vm200, %v195, %v198
  %202 = vst [vmem:[%s5] sm:$0x3] %v201
  // Predicated region
  $region22: #{mlp_classifier_forward.1} parent=0 // pred_check
    _
  $region23: #{mlp_classifier_forward.1} parent=0 // pred_check_branch
    %204 = sbr.rel (0) target = $region25
  $region24: #{mlp_classifier_forward.1} parent=0 // pred_region
    _
  $region25: #{mlp_classifier_forward.1} parent=0 // pred_fallthru
    _
  // Predicated region
  $region26: #{mlp_classifier_forward.1} parent=0 // pred_check
    _
  $region27: #{mlp_classifier_forward.1} parent=0 // pred_check_branch
    %206 = sbr.rel (0) target = $region29
  $region28: #{mlp_classifier_forward.1} parent=0 // pred_region
    _
  $region29: #{mlp_classifier_forward.1} parent=0 // pred_fallthru
    _

</llo_original>
